<compile_context>
chip_gen: v7x
topology: tpu7x:2x2x1
jax: 0.10.0
libtpu: 0.0.40
codegen_flags: <defaults>
</compile_context>

<pallas_src>
import functools

import jax
import jax.numpy as jnp
from jax.experimental import pallas as pl
from jax.experimental.pallas import tpu as pltpu

LN_EPS = 1e-5   # torch.nn.LayerNorm default eps
KSIZE = 3       # kernel_size=3, stride=1, padding=1, dilation=1


def _bsconvu_kernel(x_ref, pw_ref, sum_ref, a_ref, vec_ref, o_ref, *,
                    h, inv_cout, mxu_dtype):
    # x_ref:   (M, W*Cin)        M = batch_tile * H rows (flat NHWC, lane-dense)
    # pw_ref:  (W*Cin, W*Cout)   kron(I_W, pw_w.T)        [mxu_dtype]
    # sum_ref: (W*Cout, W*Cout)  kron(I_W, ones(C,C))     [f32, exact]
    # a_ref:   (3*W*Cout, W*Cout) vstack of banded tap matrices A0;A1;A2 [mxu_dtype]
    # vec_ref: (4, W*Cout)       [pw_bias, ln_gamma, ln_beta, dw_bias] tiled, f32
    # o_ref:   (M, W*Cout)
    f32 = jnp.float32
    x = x_ref[...]
    vec = vec_ref[...]
    pw_b, gamma, beta, dw_b = vec[0:1], vec[1:2], vec[2:3], vec[3:4]

    # ---- pointwise linear (one MXU dot, lane-dense output) ----
    y = jnp.dot(x.astype(mxu_dtype), pw_ref[...],
                preferred_element_type=f32) + pw_b              # (M, WCo) f32
    m, wco = y.shape

    # ---- LayerNorm: ONE fused stat matmul for sum and sum-of-squares ----
    stats = jnp.dot(jnp.concatenate([y, y * y], axis=0), sum_ref[...],
                    preferred_element_type=f32)                  # (2M, WCo)
    mean = stats[:m] * inv_cout
    var = jnp.maximum(stats[m:] * inv_cout - mean * mean, 0.0)   # biased (torch LN)
    yn = (y - mean) * jax.lax.rsqrt(var + LN_EPS) * gamma + beta

    # ---- depthwise 3x3: sublane row shifts + boundary zero mask (no MXU) ----
    # Static-offset zero-row concat == pltpu.roll(yn, +-1, axis=0) with the
    # wrap row zeroed; the iota mask also zeroes the inter-image boundaries of
    # the batch_tile images folded into this block.
    zrow = jnp.zeros((1, wco), f32)
    row = jax.lax.broadcasted_iota(jnp.int32, (m, wco), 0) % h
    y_up = jnp.where(row > 0,
                     jnp.concatenate([zrow, yn[:m - 1]], axis=0), 0.0)  # y[h-1]
    y_dn = jnp.where(row < h - 1,
                     jnp.concatenate([yn[1:], zrow], axis=0), 0.0)      # y[h+1]

    # ---- single K-concatenated tap matmul: (M, 3*WCo) @ (3*WCo, WCo) ----
    taps_in = jnp.concatenate([y_up, yn, y_dn], axis=1).astype(mxu_dtype)
    out = jnp.dot(taps_in, a_ref[...], preferred_element_type=f32) + dw_b

    o_ref[...] = out.astype(o_ref.dtype)       # full-width, unmasked lane store


def init_bsconvu_constants(pw_w, pw_b, gamma, beta, dw_w, dw_b, *, width,
                           matmul_dtype=jnp.float32):
    """Build the constant MXU operand matrices ONCE (weight-load time).

    Hoisted out of the per-call forward path: these krons (~300 KB of
    constants) previously ran as XLA ops on every call and dominated the
    launch cost of the microsecond-scale kernel.
    """
    f32 = jnp.float32
    cout, cin = pw_w.shape
    w = width
    wci, wco = w * cin, w * cout
    assert wco == 128, f"kernel assumes W*Cout == 128 (one lane tile), got {wco}"
    assert wci <= 128, f"kernel assumes W*Cin <= 128, got {wci}"

    eye_w = jnp.eye(w, dtype=f32)
    # pointwise Linear weight as a block-diagonal (W*Cin, W*Cout) matrix
    pw_big = jnp.kron(eye_w, pw_w.T.astype(f32)).astype(matmul_dtype)
    # per-pixel channel-group sum; broadcasts the group stat to all C lanes.
    # Kept f32 always: all-ones is exact and the LN-stat dot stays accurate.
    sum_mat = jnp.kron(eye_w, jnp.ones((cout, cout), f32))
    # depthwise taps: A_ky[w'*C+c, w*C+c] = k[c,ky,kx] with w' = w + kx - 1;
    # stacked along K so the 3 ky contributions are one MXU accumulation.
    a_mats = [sum(jnp.kron(jnp.eye(w, k=1 - kx, dtype=f32),
                           jnp.diag(dw_w[:, 0, ky, kx].astype(f32)))
                  for kx in range(KSIZE))
              for ky in range(KSIZE)]
    a_stack = jnp.concatenate(a_mats, axis=0).astype(matmul_dtype)  # (3*WCo, WCo)
    # per-lane parameter vectors, tiled over W so they are lane-dense
    vecs = jnp.stack([jnp.tile(pw_b.astype(f32), w),
                      jnp.tile(gamma.astype(f32), w),
                      jnp.tile(beta.astype(f32), w),
                      jnp.tile(dw_b.astype(f32), w)])               # (4, WCo)
    return pw_big, sum_mat, a_stack, vecs


def _pick_batch_tile(b, h, target_rows=256):
    """Largest divisor of b with batch_tile*h <= target_rows (MXU amortization)."""
    bt = max(1, min(b, max(1, target_rows // max(h, 1))))
    while b % bt:
        bt -= 1
    return bt


def _bsconvu_flat_call(x2d, pw_big, sum_mat, a_stack, vecs, *, h, cout,
                       batch_tile, matmul_dtype, out_dtype):
    """Core pallas_call on the flat lane-dense (B*H, W*C) layout (no relayouts)."""
    rows, wci = x2d.shape
    wco = vecs.shape[1]
    b = rows // h
    bt = batch_tile if batch_tile is not None else _pick_batch_tile(b, h)
    assert b % bt == 0, (b, bt)
    mb = bt * h                                   # rows per grid step

    kernel = functools.partial(_bsconvu_kernel, h=h, inv_cout=1.0 / cout,
                               mxu_dtype=matmul_dtype)
    return pl.pallas_call(
        kernel,
        out_shape=jax.ShapeDtypeStruct((rows, wco), out_dtype),
        grid_spec=pltpu.PrefetchScalarGridSpec(
            num_scalar_prefetch=0,
            grid=(b // bt,),
            in_specs=[
                pl.BlockSpec((mb, wci), lambda g: (g, 0)),
                pl.BlockSpec(pw_big.shape, lambda g: (0, 0)),
                pl.BlockSpec(sum_mat.shape, lambda g: (0, 0)),
                pl.BlockSpec(a_stack.shape, lambda g: (0, 0)),
                pl.BlockSpec(vecs.shape, lambda g: (0, 0)),
            ],
            out_specs=pl.BlockSpec((mb, wco), lambda g: (g, 0)),
        ),
        compiler_params=pltpu.CompilerParams(
            dimension_semantics=("parallel",),      # megacore-shard over batch blocks
            vmem_limit_bytes=32 * 1024 * 1024),
    )(x2d, pw_big, sum_mat, a_stack, vecs)


@functools.partial(jax.jit,
                   static_argnames=("cout", "batch_tile", "matmul_dtype"))
def bsconvu_apply(x_nchw, pw_big, sum_mat, a_stack, vecs, *, cout,
                  batch_tile=None, matmul_dtype=jnp.float32):
    """NCHW-in / NCHW-out wrapper (module parity).

    The NCHW<->NHWC transposes here are pure plumbing; production callers that
    already hold NHWC / flat activations should call `_bsconvu_flat_call`
    directly and skip the two extra HBM passes.
    """
    b, cin, h, w = x_nchw.shape
    wci, wco = w * cin, w * cout
    assert wco == vecs.shape[1]

    x2d = jnp.transpose(x_nchw, (0, 2, 3, 1)).reshape(b * h, wci)   # flat NHWC
    out2d = _bsconvu_flat_call(
        x2d, pw_big, sum_mat, a_stack, vecs, h=h, cout=cout,
        batch_tile=batch_tile, matmul_dtype=matmul_dtype,
        out_dtype=x_nchw.dtype)
    out = out2d.reshape(b, h, w, cout)
    return jnp.transpose(out, (0, 3, 1, 2))                         # NHWC -> NCHW


def bsconvu_ref(x_nchw, pw_w, pw_b, gamma, beta, dw_w, dw_b):
    """Pure-JAX reference mirroring the PyTorch forward."""
    cout = pw_w.shape[0]
    x = jnp.transpose(x_nchw, (0, 2, 3, 1))              # NHWC
    y = x @ pw_w.T + pw_b                                # nn.Linear
    mean = y.mean(-1, keepdims=True)
    var = ((y - mean) ** 2).mean(-1, keepdims=True)
    y = (y - mean) / jnp.sqrt(var + LN_EPS) * gamma + beta
    y_nchw = jnp.transpose(y, (0, 3, 1, 2))
    out = jax.lax.conv_general_dilated(
        y_nchw, dw_w, window_strides=(1, 1), padding=((1, 1), (1, 1)),
        dimension_numbers=("NCHW", "OIHW", "NCHW"),
        feature_group_count=cout)
    return out + dw_b[None, :, None, None]


if __name__ == "__main__":
    B, Cin, H, W = 2, 4, 16, 16
    Cout = 8

    key = jax.random.PRNGKey(0)
    kx_, k1, k2, k3, k4, k5, k6 = jax.random.split(key, 7)

    x = jax.random.normal(kx_, (B, Cin, H, W), dtype=jnp.float32)
    pw_w = 0.2 * jax.random.normal(k1, (Cout, Cin), dtype=jnp.float32)
    pw_b = 0.1 * jax.random.normal(k2, (Cout,), dtype=jnp.float32)
    gamma = 1.0 + 0.1 * jax.random.normal(k3, (Cout,), dtype=jnp.float32)
    beta = 0.1 * jax.random.normal(k4, (Cout,), dtype=jnp.float32)
    dw_w = 0.2 * jax.random.normal(k5, (Cout, 1, KSIZE, KSIZE), dtype=jnp.float32)
    dw_b = 0.1 * jax.random.normal(k6, (Cout,), dtype=jnp.float32)

    ref = bsconvu_ref(x, pw_w, pw_b, gamma, beta, dw_w, dw_b)

    # --- f32 MXU-operand path (tight numerical check) ---
    # Constants are built ONCE here (weight-load time), not inside the jitted
    # forward -- perf-review item #1.
    consts_f32 = init_bsconvu_constants(pw_w, pw_b, gamma, beta, dw_w, dw_b,
                                        width=W)
    out = jax.block_until_ready(bsconvu_apply(x, *consts_f32, cout=Cout))
    assert out.shape == (B, Cout, H, W), out.shape
    assert jnp.allclose(out, ref, atol=1e-4, rtol=1e-4), \
        float(jnp.max(jnp.abs(out - ref)))

    # --- bf16 MXU-operand path (v5e/v6e/v7x MXU rate; f32 accumulation + f32 LN) ---
    consts_bf16 = init_bsconvu_constants(pw_w, pw_b, gamma, beta, dw_w, dw_b,
                                         width=W, matmul_dtype=jnp.bfloat16)
    out_bf16 = jax.block_until_ready(
        bsconvu_apply(x, *consts_bf16, cout=Cout, matmul_dtype=jnp.bfloat16))
    err_bf16 = float(jnp.max(jnp.abs(out_bf16 - ref)))
    assert err_bf16 < 1e-1, err_bf16        # bf16 operand-quantization budget

    print("KERNEL_OK")
</pallas_src>

<mosaic_0001>
module attributes {stable_mosaic.version = 11 : i64} {
  func.func @_bsconvu_kernel(%arg0: i32, %arg1: memref<32x64xf32, #tpu.memory_space<vmem>>, %arg2: memref<64x128xf32, #tpu.memory_space<vmem>>, %arg3: memref<128x128xf32, #tpu.memory_space<vmem>>, %arg4: memref<384x128xf32, #tpu.memory_space<vmem>>, %arg5: memref<4x128xf32, #tpu.memory_space<vmem>>, %arg6: memref<32x128xf32, #tpu.memory_space<vmem>>) attributes {dimension_semantics = [#tpu.dimension_semantics<parallel>], iteration_bounds = array<i64: 1>, scalar_prefetch = 0 : i64, scratch_operands = 0 : i64, tpu.core_type = #tpu.core_type<tc>, window_params = [{transform_indices = @transform_0, window_bounds = array<i64: 32, 64>}, {pipeline_mode = #tpu.pipeline_mode<synchronous>, transform_indices = @transform_1, window_bounds = array<i64: 64, 128>}, {pipeline_mode = #tpu.pipeline_mode<synchronous>, transform_indices = @transform_2, window_bounds = array<i64: 128, 128>}, {pipeline_mode = #tpu.pipeline_mode<synchronous>, transform_indices = @transform_3, window_bounds = array<i64: 384, 128>}, {pipeline_mode = #tpu.pipeline_mode<synchronous>, transform_indices = @transform_4, window_bounds = array<i64: 4, 128>}, {transform_indices = @transform_5, window_bounds = array<i64: 32, 128>}]} {
    %c0 = arith.constant 0 : index
    %c0_0 = arith.constant 0 : index
    %0 = vector.load %arg1[%c0, %c0_0] : memref<32x64xf32, #tpu.memory_space<vmem>>, vector<32x64xf32>
    %c0_1 = arith.constant 0 : index
    %c0_2 = arith.constant 0 : index
    %1 = vector.load %arg5[%c0_1, %c0_2] : memref<4x128xf32, #tpu.memory_space<vmem>>, vector<4x128xf32>
    %2 = vector.extract_strided_slice %1 {offsets = [0, 0], sizes = [1, 128], strides = [1, 1]} : vector<4x128xf32> to vector<1x128xf32>
    %3 = vector.extract_strided_slice %1 {offsets = [1, 0], sizes = [1, 128], strides = [1, 1]} : vector<4x128xf32> to vector<1x128xf32>
    %4 = vector.extract_strided_slice %1 {offsets = [2, 0], sizes = [1, 128], strides = [1, 1]} : vector<4x128xf32> to vector<1x128xf32>
    %5 = vector.extract_strided_slice %1 {offsets = [3, 0], sizes = [1, 128], strides = [1, 1]} : vector<4x128xf32> to vector<1x128xf32>
    %c0_3 = arith.constant 0 : index
    %c0_4 = arith.constant 0 : index
    %6 = vector.load %arg2[%c0_3, %c0_4] : memref<64x128xf32, #tpu.memory_space<vmem>>, vector<64x128xf32>
    %cst = arith.constant dense<0.000000e+00> : vector<32x128xf32>
    %7 = tpu.matmul %0, %6, %cst {dimension_numbers = #tpu.dot_dimension_numbers<[1], [0], [0], [1], [0, 0, 1, 1], [], []>} : vector<32x64xf32>, vector<64x128xf32>, vector<32x128xf32> -> vector<32x128xf32>
    %8 = vector.broadcast %2 : vector<1x128xf32> to vector<32x128xf32>
    %9 = arith.addf %7, %8 : vector<32x128xf32>
    %10 = arith.mulf %9, %9 : vector<32x128xf32>
    %11 = tpu.concatenate %9, %10 in 0 : vector<32x128xf32>, vector<32x128xf32> -> vector<64x128xf32>
    %c0_5 = arith.constant 0 : index
    %c0_6 = arith.constant 0 : index
    %12 = vector.load %arg3[%c0_5, %c0_6] : memref<128x128xf32, #tpu.memory_space<vmem>>, vector<128x128xf32>
    %cst_7 = arith.constant dense<0.000000e+00> : vector<64x128xf32>
    %13 = tpu.matmul %11, %12, %cst_7 {dimension_numbers = #tpu.dot_dimension_numbers<[1], [0], [0], [1], [0, 0, 1, 1], [], []>} : vector<64x128xf32>, vector<128x128xf32>, vector<64x128xf32> -> vector<64x128xf32>
    %14 = vector.extract_strided_slice %13 {offsets = [0, 0], sizes = [32, 128], strides = [1, 1]} : vector<64x128xf32> to vector<32x128xf32>
    %cst_8 = arith.constant 1.250000e-01 : f32
    %15 = vector.broadcast %cst_8 : f32 to vector<32x128xf32>
    %16 = arith.mulf %14, %15 : vector<32x128xf32>
    %17 = vector.extract_strided_slice %13 {offsets = [32, 0], sizes = [32, 128], strides = [1, 1]} : vector<64x128xf32> to vector<32x128xf32>
    %cst_9 = arith.constant 1.250000e-01 : f32
    %18 = vector.broadcast %cst_9 : f32 to vector<32x128xf32>
    %19 = arith.mulf %17, %18 : vector<32x128xf32>
    %20 = arith.mulf %16, %16 : vector<32x128xf32>
    %21 = arith.subf %19, %20 : vector<32x128xf32>
    %cst_10 = arith.constant 0.000000e+00 : f32
    %22 = vector.broadcast %cst_10 : f32 to vector<32x128xf32>
    %23 = arith.maximumf %21, %22 : vector<32x128xf32>
    %24 = arith.subf %9, %16 : vector<32x128xf32>
    %cst_11 = arith.constant 9.99999974E-6 : f32
    %25 = vector.broadcast %cst_11 : f32 to vector<32x128xf32>
    %26 = arith.addf %23, %25 : vector<32x128xf32>
    %27 = math.rsqrt %26 : vector<32x128xf32>
    %28 = arith.mulf %24, %27 : vector<32x128xf32>
    %29 = vector.broadcast %3 : vector<1x128xf32> to vector<32x128xf32>
    %30 = arith.mulf %28, %29 : vector<32x128xf32>
    %31 = vector.broadcast %4 : vector<1x128xf32> to vector<32x128xf32>
    %32 = arith.addf %30, %31 : vector<32x128xf32>
    %cst_12 = arith.constant 0.000000e+00 : f32
    %33 = vector.broadcast %cst_12 : f32 to vector<1x128xf32>
    %34 = tpu.iota {dimensions = array<i32: 0>} : vector<32x128xi32>
    %c16_i32 = arith.constant 16 : i32
    %c0_i32 = arith.constant 0 : i32
    %35 = arith.cmpi eq, %c16_i32, %c0_i32 : i32
    %c1_i32 = arith.constant 1 : i32
    %36 = arith.select %35, %c1_i32, %c16_i32 : i32
    %37 = vector.broadcast %36 : i32 to vector<32x128xi32>
    %38 = arith.remsi %34, %37 : vector<32x128xi32>
    %c0_i32_13 = arith.constant 0 : i32
    %39 = vector.broadcast %c0_i32_13 : i32 to vector<32x128xi32>
    %40 = arith.cmpi ne, %38, %39 : vector<32x128xi32>
    %c0_i32_14 = arith.constant 0 : i32
    %41 = vector.broadcast %c0_i32_14 : i32 to vector<32x128xi32>
    %42 = arith.cmpi slt, %38, %41 : vector<32x128xi32>
    %c0_i32_15 = arith.constant 0 : i32
    %43 = arith.cmpi slt, %36, %c0_i32_15 : i32
    %44 = vector.broadcast %43 : i1 to vector<32x128xi1>
    %45 = vector.broadcast %44 : vector<32x128xi1> to vector<32x128xi1>
    %46 = arith.xori %42, %45 : vector<32x128xi1>
    %47 = arith.andi %46, %40 : vector<32x128xi1>
    %48 = vector.broadcast %36 : i32 to vector<32x128xi32>
    %49 = arith.addi %38, %48 : vector<32x128xi32>
    %50 = arith.select %47, %49, %38 : vector<32x128xi1>, vector<32x128xi32>
    %c0_i32_16 = arith.constant 0 : i32
    %51 = vector.broadcast %c0_i32_16 : i32 to vector<32x128xi32>
    %52 = arith.cmpi sgt, %50, %51 : vector<32x128xi32>
    %53 = vector.extract_strided_slice %32 {offsets = [0, 0], sizes = [31, 128], strides = [1, 1]} : vector<32x128xf32> to vector<31x128xf32>
    %54 = tpu.concatenate %33, %53 in 0 : vector<1x128xf32>, vector<31x128xf32> -> vector<32x128xf32>
    %cst_17 = arith.constant 0.000000e+00 : f32
    %55 = vector.broadcast %cst_17 : f32 to vector<32x128xf32>
    %56 = arith.select %52, %54, %55 : vector<32x128xi1>, vector<32x128xf32>
    %c15_i32 = arith.constant 15 : i32
    %57 = vector.broadcast %c15_i32 : i32 to vector<32x128xi32>
    %58 = arith.cmpi slt, %50, %57 : vector<32x128xi32>
    %59 = vector.extract_strided_slice %32 {offsets = [1, 0], sizes = [31, 128], strides = [1, 1]} : vector<32x128xf32> to vector<31x128xf32>
    %60 = tpu.concatenate %59, %33 in 0 : vector<31x128xf32>, vector<1x128xf32> -> vector<32x128xf32>
    %cst_18 = arith.constant 0.000000e+00 : f32
    %61 = vector.broadcast %cst_18 : f32 to vector<32x128xf32>
    %62 = arith.select %58, %60, %61 : vector<32x128xi1>, vector<32x128xf32>
    %63 = tpu.concatenate %56, %32, %62 in 1 : vector<32x128xf32>, vector<32x128xf32>, vector<32x128xf32> -> vector<32x384xf32>
    %c0_19 = arith.constant 0 : index
    %c0_20 = arith.constant 0 : index
    %64 = vector.load %arg4[%c0_19, %c0_20] : memref<384x128xf32, #tpu.memory_space<vmem>>, vector<384x128xf32>
    %cst_21 = arith.constant dense<0.000000e+00> : vector<32x128xf32>
    %65 = tpu.matmul %63, %64, %cst_21 {dimension_numbers = #tpu.dot_dimension_numbers<[1], [0], [0], [1], [0, 0, 1, 1], [], []>} : vector<32x384xf32>, vector<384x128xf32>, vector<32x128xf32> -> vector<32x128xf32>
    %66 = vector.broadcast %5 : vector<1x128xf32> to vector<32x128xf32>
    %67 = arith.addf %65, %66 : vector<32x128xf32>
    %c0_22 = arith.constant 0 : index
    %c0_23 = arith.constant 0 : index
    %68 = vector.load %arg6[%c0_22, %c0_23] : memref<32x128xf32, #tpu.memory_space<vmem>>, vector<32x128xf32>
    tpu.vector_store %arg6[%c0_22, %c0_23], %67 {strides = array<i32>} : memref<32x128xf32, #tpu.memory_space<vmem>>, vector<32x128xf32>,
    return
  }
  func.func @transform_0(%arg0: i32) -> (i32, i32) {
    %c0_i32 = arith.constant 0 : i32
    %c0_i32_0 = arith.constant 0 : i32
    return %arg0, %c0_i32 : i32, i32
  }
  func.func @transform_1(%arg0: i32) -> (i32, i32) {
    %c0_i32 = arith.constant 0 : i32
    %c0_i32_0 = arith.constant 0 : i32
    %c0_i32_1 = arith.constant 0 : i32
    return %c0_i32, %c0_i32_0 : i32, i32
  }
  func.func @transform_2(%arg0: i32) -> (i32, i32) {
    %c0_i32 = arith.constant 0 : i32
    %c0_i32_0 = arith.constant 0 : i32
    %c0_i32_1 = arith.constant 0 : i32
    return %c0_i32, %c0_i32_0 : i32, i32
  }
  func.func @transform_3(%arg0: i32) -> (i32, i32) {
    %c0_i32 = arith.constant 0 : i32
    %c0_i32_0 = arith.constant 0 : i32
    %c0_i32_1 = arith.constant 0 : i32
    return %c0_i32, %c0_i32_0 : i32, i32
  }
  func.func @transform_4(%arg0: i32) -> (i32, i32) {
    %c0_i32 = arith.constant 0 : i32
    %c0_i32_0 = arith.constant 0 : i32
    %c0_i32_1 = arith.constant 0 : i32
    return %c0_i32, %c0_i32_0 : i32, i32
  }
  func.func @transform_5(%arg0: i32) -> (i32, i32) {
    %c0_i32 = arith.constant 0 : i32
    %c0_i32_0 = arith.constant 0 : i32
    return %arg0, %c0_i32 : i32, i32
  }
}

</mosaic_0001>

<llo_original>
// kernel: bsconvu_apply.1
$region0: #{bsconvu_apply.1}
  #allocation0 [shape = 'u32[]', space=smem, size = 0x4, offset = 0x4, fixed_abs, tag = 'smem constant byte address 0x4 - core index']
  #allocation1 [shape = 'u32[144,128]{1,0:T(1,128)}', space=vmem, size = 0x12000, scoped, tag = 'internal scratch']
  %s0 = inlined_call_operand.vmem [shape: f32[32,64], index: 0, kind: input, shape index: {}]
  %s1 = inlined_call_operand.hbm [shape: f32[64,128], index: 1, kind: input, shape index: {}]
  %s2 = inlined_call_operand.vmem [shape: f32[128,128], index: 2, kind: input, shape index: {}]
  %s3 = inlined_call_operand.vmem [shape: f32[384,128], index: 3, kind: input, shape index: {}]
  %s4 = inlined_call_operand.vmem [shape: f32[4,128], index: 4, kind: input, shape index: {}]
  %s5 = inlined_call_operand.vmem [shape: f32[32,128], index: 5, kind: output, shape index: {}]
  %s6 = sld [smem:[#allocation0]]
  $region34: #{bsconvu_apply.1} parent=0
    _
  %s8 = ssub.s32 1, %s6
  %s9 = scalar_select 0, %s8, %s6
  $region1: #{bsconvu_apply.1} parent=0
    #allocation2 [shape = 'u8[32768]{0}', space=vmem, size = 0x8000, scoped, tag = 'input window, operand 1, single buffered']
    #allocation3 [shape = 's32[1]{0}', space=sflag, size = 0x4, scoped, tag = 'scoped memory for bsconvu_apply.1']
    %10 = vsyncpa [#allocation3], 0
    // Predicated region
    $region2: #{bsconvu_apply.1} parent=1 // pred_check
      _
    $region3: #{bsconvu_apply.1} parent=1 // pred_check_branch
      %12 = sbr.rel (0) target = $region5
    $region4: #{bsconvu_apply.1} parent=1 // pred_region
      _
    $region5: #{bsconvu_apply.1} parent=1 // pred_fallthru
      _
    // Predicated region
    $region6: #{bsconvu_apply.1} parent=1 // pred_check
      _
    $region7: #{bsconvu_apply.1} parent=1 // pred_check_branch
      %14 = sbr.rel (0) target = $region9
    $region8: #{bsconvu_apply.1} parent=1 // pred_region
      %s16 = ssub.s32 1024, 1024
      %17 = vsyncadd [#allocation3], %s16
      %s18 = sshll.u32 [#allocation2], 4
      %s19 = int_to_ptr.vmem [resolvable:$true] %s18
      %24 = dma.hbm_to_vmem [thread:$0]  %s1, 1024, %s19, [#allocation3], 128, 128, 8
    $region9: #{bsconvu_apply.1} parent=1 // pred_fallthru
      _
    // Predicated region
    $region10: #{bsconvu_apply.1} parent=1 // pred_check
      _
    $region11: #{bsconvu_apply.1} parent=1 // pred_check_branch
      %26 = sbr.rel (0) target = $region13
    $region12: #{bsconvu_apply.1} parent=1 // pred_region
      _
    $region13: #{bsconvu_apply.1} parent=1 // pred_fallthru
      _
    // Predicated region
    $region14: #{bsconvu_apply.1} parent=1 // pred_check
      _
    $region15: #{bsconvu_apply.1} parent=1 // pred_check_branch
      %28 = sbr.rel (0) target = $region17
    $region16: #{bsconvu_apply.1} parent=1 // pred_region
      _
    $region17: #{bsconvu_apply.1} parent=1 // pred_fallthru
      _
    // Predicated region
    $region18: #{bsconvu_apply.1} parent=1 // pred_check
      _
    $region19: #{bsconvu_apply.1} parent=1 // pred_check_branch
      %30 = sbr.rel (0) target = $region21
    $region20: #{bsconvu_apply.1} parent=1 // pred_region
      _
    $region21: #{bsconvu_apply.1} parent=1 // pred_fallthru
      _
    // Predicated region
    $region22: #{bsconvu_apply.1} parent=1 // pred_check
      _
    $region23: #{bsconvu_apply.1} parent=1 // pred_check_branch
      %32 = sbr.rel (0) target = $region25
    $region24: #{bsconvu_apply.1} parent=1 // pred_region
      %33 = dma.done [#allocation3], 1024
    $region25: #{bsconvu_apply.1} parent=1 // pred_fallthru
      _
    %v34 = vld [vmem:[%s0] sm:$0xff]
    %v35 = vld [vmem:[%s0 + $0x8] sm:$0xff]
    %v36 = vld [vmem:[%s0 + $0x10] sm:$0xff]
    %v37 = vld [vmem:[%s0 + $0x18] sm:$0xff]
    %v38 = vld [vmem:[%s4] sm:$0xf]
    %v39 = vld [vmem:[#allocation2] sm:$0xff]
    %v40 = vld [vmem:[#allocation2 + $0x8] sm:$0xff]
    %v41 = vld [vmem:[#allocation2 + $0x10] sm:$0xff]
    %v42 = vld [vmem:[#allocation2 + $0x18] sm:$0xff]
    %v43 = vld [vmem:[#allocation2 + $0x20] sm:$0xff]
    %v44 = vld [vmem:[#allocation2 + $0x28] sm:$0xff]
    %v45 = vld [vmem:[#allocation2 + $0x30] sm:$0xff]
    %v46 = vld [vmem:[#allocation2 + $0x38] sm:$0xff]
    %v47 = vlaneseq
    %v48 = vshrl.u32 %v47, 7
    %v49 = vsub.s32 0, %v48
    %v50 = vrot.slane %v38, %v49
    %vm51 = vcmask 523264
    %v53 = vsel %vm51, %v34, 0
    %v56 = vsel %vm51, %v35, 0
    %v59 = vsel %vm51, %v36, 0
    %v62 = vsel %vm51, %v37, 0
    %64 = vmatprep.subr.mxu0 0.0
    %65 = vmatpush1.msra.mxu0 %v39
    %66 = vmatprep.subr.mxu0 0.0
    %67 = vmatpush1.msra.mxu0 %v40
    %68 = vmatprep.subr.mxu0 0.0
    %69 = vmatpush1.msra.mxu0 %v41
    %70 = vmatprep.subr.mxu0 0.0
    %71 = vmatpush1.msra.mxu0 %v42
    %72 = vmatprep.subr.mxu0 0.0
    %73 = vmatpush1.msra.mxu0 %v43
    %74 = vmatprep.subr.mxu0 0.0
    %75 = vmatpush1.msra.mxu0 %v44
    %76 = vmatprep.subr.mxu0 0.0
    %77 = vmatpush1.msra.mxu0 %v45
    %78 = vmatprep.subr.mxu0 0.0
    %79 = vmatpush1.msra.mxu0 %v46
    %80 = vmatprep.subr.mxu0 0.0
    %81 = vmatpush1.msra.mxu0 0.0
    %82 = vmatprep.subr.mxu0 0.0
    %83 = vmatpush1.msra.mxu0 0.0
    %84 = vmatprep.subr.mxu0 0.0
    %85 = vmatpush1.msra.mxu0 0.0
    %86 = vmatprep.subr.mxu0 0.0
    %87 = vmatpush1.msra.mxu0 0.0
    %88 = vmatprep.subr.mxu0 0.0
    %89 = vmatpush1.msra.mxu0 0.0
    %90 = vmatprep.subr.mxu0 0.0
    %91 = vmatpush1.msra.mxu0 0.0
    %92 = vmatprep.subr.mxu0 0.0
    %93 = vmatpush1.msra.mxu0 0.0
    %94 = vmatprep.subr.mxu0 0.0
    %95 = vmatpush1.msra.mxu0 0.0
    %96 = vmatprep.subr.mxu0 0.0
    %97 = vmatpush1.msra.mxu0 0.0
    %98 = vmatprep.subr.mxu0 0.0
    %99 = vmatpush1.msra.mxu0 0.0
    %100 = vmatprep.subr.mxu0 0.0
    %101 = vmatpush1.msra.mxu0 0.0
    %102 = vmatprep.subr.mxu0 0.0
    %103 = vmatpush1.msra.mxu0 0.0
    %104 = vmatprep.subr.mxu0 0.0
    %105 = vmatpush1.msra.mxu0 0.0
    %106 = vmatprep.subr.mxu0 0.0
    %107 = vmatpush1.msra.mxu0 0.0
    %108 = vmatprep.subr.mxu0 0.0
    %109 = vmatpush1.msra.mxu0 0.0
    %110 = vmatprep.subr.mxu0 0.0
    %111 = vmatpush1.msra.mxu0 0.0
    %112 = vmatprep.subr.mxu0 0.0
    %113 = vmatpush1.msra.mxu0 0.0
    %114 = vmatprep.subr.mxu0 0.0
    %115 = vmatpush1.msra.mxu0 0.0
    %116 = vmatprep.subr.mxu0 0.0
    %117 = vmatpush1.msra.mxu0 0.0
    %118 = vmatprep.subr.mxu0 0.0
    %119 = vmatpush1.msra.mxu0 0.0
    %120 = vmatprep.subr.mxu0 0.0
    %121 = vmatpush1.msra.mxu0 0.0
    %122 = vmatprep.subr.mxu0 0.0
    %123 = vmatpush1.msra.mxu0 0.0
    %124 = vmatprep.subr.mxu0 0.0
    %125 = vmatpush1.msra.mxu0 0.0
    %126 = vmatprep.subr.mxu0 0.0
    %127 = vmatpush1.msra.mxu0 0.0
    %128 = vmatprep.mubr.f32.mxu0 0.0
    %129 = vmatmul.mubr.f32.gmra.mrb[0].mxu0 %v53
    %v130 = vpop.f32.mrb[0].mxu0
    %v131 = vadd.f32 %v50, %v130
    %v132 = vpop.f32.mrb[0].mxu0
    %133 = vmatprep.mubr.f32.mxu0 0.0
    %134 = vmatmul.mubr.f32.gmra.mrb[0].mxu0 %v56
    %v135 = vpop.f32.mrb[0].mxu0
    %v136 = vadd.f32 %v50, %v135
    %v137 = vpop.f32.mrb[0].mxu0
    %138 = vmatprep.mubr.f32.mxu0 0.0
    %139 = vmatmul.mubr.f32.gmra.mrb[0].mxu0 %v59
    %v140 = vpop.f32.mrb[0].mxu0
    %v141 = vadd.f32 %v50, %v140
    %v142 = vpop.f32.mrb[0].mxu0
    %143 = vmatprep.mubr.f32.mxu0 0.0
    %144 = vmatmul.mubr.f32.gmra.mrb[0].mxu0 %v62
    %v145 = vpop.f32.mrb[0].mxu0
    %v146 = vadd.f32 %v50, %v145
    %v147 = vpop.f32.mrb[0].mxu0
    %148 = vdwg.mxu0
    %v149 = vmul.f32 %v131, %v131
    %v150 = vmul.f32 %v136, %v136
    %v151 = vmul.f32 %v141, %v141
    %v152 = vmul.f32 %v146, %v146
    %v153 = vld [vmem:[%s2] sm:$0xff]
    %v154 = vld [vmem:[%s2 + $0x8] sm:$0xff]
    %v155 = vld [vmem:[%s2 + $0x10] sm:$0xff]
    %v156 = vld [vmem:[%s2 + $0x18] sm:$0xff]
    %v157 = vld [vmem:[%s2 + $0x20] sm:$0xff]
    %v158 = vld [vmem:[%s2 + $0x28] sm:$0xff]
    %v159 = vld [vmem:[%s2 + $0x30] sm:$0xff]
    %v160 = vld [vmem:[%s2 + $0x38] sm:$0xff]
    %v161 = vld [vmem:[%s2 + $0x40] sm:$0xff]
    %v162 = vld [vmem:[%s2 + $0x48] sm:$0xff]
    %v163 = vld [vmem:[%s2 + $0x50] sm:$0xff]
    %v164 = vld [vmem:[%s2 + $0x58] sm:$0xff]
    %v165 = vld [vmem:[%s2 + $0x60] sm:$0xff]
    %v166 = vld [vmem:[%s2 + $0x68] sm:$0xff]
    %v167 = vld [vmem:[%s2 + $0x70] sm:$0xff]
    %v168 = vld [vmem:[%s2 + $0x78] sm:$0xff]
    %169 = vmatprep.subr.mxu0 0.0
    %170 = vmatpush1.msra.mxu0 %v153
    %171 = vmatprep.subr.mxu0 0.0
    %172 = vmatpush1.msra.mxu0 %v154
    %173 = vmatprep.subr.mxu0 0.0
    %174 = vmatpush1.msra.mxu0 %v155
    %175 = vmatprep.subr.mxu0 0.0
    %176 = vmatpush1.msra.mxu0 %v156
    %177 = vmatprep.subr.mxu0 0.0
    %178 = vmatpush1.msra.mxu0 %v157
    %179 = vmatprep.subr.mxu0 0.0
    %180 = vmatpush1.msra.mxu0 %v158
    %181 = vmatprep.subr.mxu0 0.0
    %182 = vmatpush1.msra.mxu0 %v159
    %183 = vmatprep.subr.mxu0 0.0
    %184 = vmatpush1.msra.mxu0 %v160
    %185 = vmatprep.subr.mxu0 0.0
    %186 = vmatpush1.msra.mxu0 %v161
    %187 = vmatprep.subr.mxu0 0.0
    %188 = vmatpush1.msra.mxu0 %v162
    %189 = vmatprep.subr.mxu0 0.0
    %190 = vmatpush1.msra.mxu0 %v163
    %191 = vmatprep.subr.mxu0 0.0
    %192 = vmatpush1.msra.mxu0 %v164
    %193 = vmatprep.subr.mxu0 0.0
    %194 = vmatpush1.msra.mxu0 %v165
    %195 = vmatprep.subr.mxu0 0.0
    %196 = vmatpush1.msra.mxu0 %v166
    %197 = vmatprep.subr.mxu0 0.0
    %198 = vmatpush1.msra.mxu0 %v167
    %199 = vmatprep.subr.mxu0 0.0
    %200 = vmatpush1.msra.mxu0 %v168
    %201 = vmatprep.subr.mxu0 0.0
    %202 = vmatpush1.msra.mxu0 0.0
    %203 = vmatprep.subr.mxu0 0.0
    %204 = vmatpush1.msra.mxu0 0.0
    %205 = vmatprep.subr.mxu0 0.0
    %206 = vmatpush1.msra.mxu0 0.0
    %207 = vmatprep.subr.mxu0 0.0
    %208 = vmatpush1.msra.mxu0 0.0
    %209 = vmatprep.subr.mxu0 0.0
    %210 = vmatpush1.msra.mxu0 0.0
    %211 = vmatprep.subr.mxu0 0.0
    %212 = vmatpush1.msra.mxu0 0.0
    %213 = vmatprep.subr.mxu0 0.0
    %214 = vmatpush1.msra.mxu0 0.0
    %215 = vmatprep.subr.mxu0 0.0
    %216 = vmatpush1.msra.mxu0 0.0
    %217 = vmatprep.subr.mxu0 0.0
    %218 = vmatpush1.msra.mxu0 0.0
    %219 = vmatprep.subr.mxu0 0.0
    %220 = vmatpush1.msra.mxu0 0.0
    %221 = vmatprep.subr.mxu0 0.0
    %222 = vmatpush1.msra.mxu0 0.0
    %223 = vmatprep.subr.mxu0 0.0
    %224 = vmatpush1.msra.mxu0 0.0
    %225 = vmatprep.subr.mxu0 0.0
    %226 = vmatpush1.msra.mxu0 0.0
    %227 = vmatprep.subr.mxu0 0.0
    %228 = vmatpush1.msra.mxu0 0.0
    %229 = vmatprep.subr.mxu0 0.0
    %230 = vmatpush1.msra.mxu0 0.0
    %231 = vmatprep.subr.mxu0 0.0
    %232 = vmatpush1.msra.mxu0 0.0
    %233 = vmatprep.mubr.f32.mxu0 0.0
    %234 = vmatmul.mubr.f32.gmra.mrb[0].mxu0 %v131
    %v235 = vpop.f32.mrb[0].mxu0
    %v236 = vadd.f32 0.0, %v235
    %v237 = vpop.f32.mrb[0].mxu0
    %238 = vmatprep.mubr.f32.mxu0 0.0
    %239 = vmatmul.mubr.f32.gmra.mrb[0].mxu0 %v136
    %v240 = vpop.f32.mrb[0].mxu0
    %v241 = vadd.f32 0.0, %v240
    %v242 = vpop.f32.mrb[0].mxu0
    %243 = vmatprep.mubr.f32.mxu0 0.0
    %244 = vmatmul.mubr.f32.gmra.mrb[0].mxu0 %v141
    %v245 = vpop.f32.mrb[0].mxu0
    %v246 = vadd.f32 0.0, %v245
    %v247 = vpop.f32.mrb[0].mxu0
    %248 = vmatprep.mubr.f32.mxu0 0.0
    %249 = vmatmul.mubr.f32.gmra.mrb[0].mxu0 %v146
    %v250 = vpop.f32.mrb[0].mxu0
    %v251 = vadd.f32 0.0, %v250
    %v252 = vpop.f32.mrb[0].mxu0
    %253 = vmatprep.mubr.f32.mxu0 0.0
    %254 = vmatmul.mubr.f32.gmra.mrb[0].mxu0 %v149
    %v255 = vpop.f32.mrb[0].mxu0
    %v256 = vadd.f32 0.0, %v255
    %v257 = vpop.f32.mrb[0].mxu0
    %258 = vmatprep.mubr.f32.mxu0 0.0
    %259 = vmatmul.mubr.f32.gmra.mrb[0].mxu0 %v150
    %v260 = vpop.f32.mrb[0].mxu0
    %v261 = vadd.f32 0.0, %v260
    %v262 = vpop.f32.mrb[0].mxu0
    %263 = vmatprep.mubr.f32.mxu0 0.0
    %264 = vmatmul.mubr.f32.gmra.mrb[0].mxu0 %v151
    %v265 = vpop.f32.mrb[0].mxu0
    %v266 = vadd.f32 0.0, %v265
    %v267 = vpop.f32.mrb[0].mxu0
    %268 = vmatprep.mubr.f32.mxu0 0.0
    %269 = vmatmul.mubr.f32.gmra.mrb[0].mxu0 %v152
    %v270 = vpop.f32.mrb[0].mxu0
    %v271 = vadd.f32 0.0, %v270
    %v272 = vpop.f32.mrb[0].mxu0
    %273 = vdwg.mxu0
    %v274 = vmul.f32 %v236, 0.125
    %v275 = vmul.f32 %v241, 0.125
    %v276 = vmul.f32 %v246, 0.125
    %v277 = vmul.f32 %v251, 0.125
    %v278 = vmul.f32 %v256, 0.125
    %v279 = vmul.f32 %v261, 0.125
    %v280 = vmul.f32 %v266, 0.125
    %v281 = vmul.f32 %v271, 0.125
    %v282 = vmul.f32 %v274, %v274
    %v283 = vmul.f32 %v275, %v275
    %v284 = vmul.f32 %v276, %v276
    %v285 = vmul.f32 %v277, %v277
    %v286 = vsub.f32 %v278, %v282
    %v287 = vsub.f32 %v279, %v283
    %v288 = vsub.f32 %v280, %v284
    %v289 = vsub.f32 %v281, %v285
    %v290 = vmax.f32 %v286, 0.0
    %v291 = vmax.f32 %v287, 0.0
    %v292 = vmax.f32 %v288, 0.0
    %v293 = vmax.f32 %v289, 0.0
    %v294 = vsub.f32 %v131, %v274
    %v295 = vsub.f32 %v136, %v275
    %v296 = vsub.f32 %v141, %v276
    %v297 = vsub.f32 %v146, %v277
    %v298 = vadd.f32 %v290, 1e-05
    %v299 = vadd.f32 %v291, 1e-05
    %v300 = vadd.f32 %v292, 1e-05
    %v301 = vadd.f32 %v293, 1e-05
    %v302 = vrsqrt.pop %v298
    %v303 = vrsqrt.pop %v299
    %v304 = vrsqrt.pop %v300
    %v305 = vrsqrt.pop %v301
    %v306 = vmul.f32 %v294, %v302
    %v307 = vmul.f32 %v295, %v303
    %v308 = vmul.f32 %v296, %v304
    %v309 = vmul.f32 %v297, %v305
    %v310 = vlaneseq
    %v311 = vshrl.u32 %v310, 7
    %v312 = vsub.s32 1, %v311
    %v313 = vrot.slane %v38, %v312
    %v314 = vmul.f32 %v306, %v313
    %v315 = vmul.f32 %v307, %v313
    %v316 = vmul.f32 %v308, %v313
    %v317 = vmul.f32 %v309, %v313
    %v318 = vlaneseq
    %v319 = vshrl.u32 %v318, 7
    %v320 = vsub.s32 2, %v319
    %v321 = vrot.slane %v38, %v320
    %v322 = vadd.f32 %v314, %v321
    %v323 = vadd.f32 %v315, %v321
    %v324 = vadd.f32 %v316, %v321
    %v325 = vadd.f32 %v317, %v321
    %v326 = vlaneseq
    %v327 = vshrl.u32 %v326, 7
    %v328 = vadd.s32 %v327, 8
    %v329 = vadd.s32 %v327, 16
    %v330 = vadd.s32 %v327, 24
    %vm331 = vcmp.lt.s32.totalorder %v327, 0
    %v332 = vsub.s32 0, %v327
    %v333 = vsel %vm331, %v332, %v327
    %v334 = vshrl.u32 %v333, 4
    %v335 = vand.u32 %v333, 15
    %v336 = vsub.s32 0, %v335
    %v337 = vsel %vm331, %v336, %v335
    %vm338 = vcmp.lt.s32.totalorder %v328, 0
    %v339 = vsub.s32 0, %v328
    %v340 = vsel %vm338, %v339, %v328
    %v341 = vshrl.u32 %v340, 4
    %v342 = vand.u32 %v340, 15
    %v343 = vsub.s32 0, %v342
    %v344 = vsel %vm338, %v343, %v342
    %vm345 = vcmp.lt.s32.totalorder %v329, 0
    %v346 = vsub.s32 0, %v329
    %v347 = vsel %vm345, %v346, %v329
    %v348 = vshrl.u32 %v347, 4
    %v349 = vand.u32 %v347, 15
    %v350 = vsub.s32 0, %v349
    %v351 = vsel %vm345, %v350, %v349
    %vm352 = vcmp.lt.s32.totalorder %v330, 0
    %v353 = vsub.s32 0, %v330
    %v354 = vsel %vm352, %v353, %v330
    %v355 = vshrl.u32 %v354, 4
    %v356 = vand.u32 %v354, 15
    %v357 = vsub.s32 0, %v356
    %v358 = vsel %vm352, %v357, %v356
    %vm359 = vcmp.ne.s32.totalorder %v337, 0
    %vm360 = vcmp.ne.s32.totalorder %v344, 0
    %vm361 = vcmp.ne.s32.totalorder %v351, 0
    %vm362 = vcmp.ne.s32.totalorder %v358, 0
    %vm363 = vcmp.lt.s32.totalorder %v337, 0
    %vm364 = vcmp.lt.s32.totalorder %v344, 0
    %vm365 = vcmp.lt.s32.totalorder %v351, 0
    %vm366 = vcmp.lt.s32.totalorder %v358, 0
    %vm367 = vmand %vm363, %vm359
    %vm368 = vmand %vm364, %vm360
    %vm369 = vmand %vm365, %vm361
    %vm370 = vmand %vm366, %vm362
    %v371 = vadd.s32 %v337, 16
    %v372 = vadd.s32 %v344, 16
    %v373 = vadd.s32 %v351, 16
    %v374 = vadd.s32 %v358, 16
    %v375 = vsel %vm367, %v371, %v337
    %v376 = vsel %vm368, %v372, %v344
    %v377 = vsel %vm369, %v373, %v351
    %v378 = vsel %vm370, %v374, %v358
    %vm379 = vcmp.gt.s32.totalorder %v375, 0
    %vm380 = vcmp.gt.s32.totalorder %v376, 0
    %vm381 = vcmp.gt.s32.totalorder %v377, 0
    %vm382 = vcmp.gt.s32.totalorder %v378, 0
    %vm387 = vcmask 1040384
    %v388 = vrot.slane %v322, 7
    %v389 = vrot.slane %v323, 7
    %v390 = vsel %vm387, %v388, %v389
    %v391 = vrot.slane %v324, 7
    %v392 = vsel %vm387, %v389, %v391
    %v393 = vrot.slane %v325, 7
    %v394 = vsel %vm387, %v391, %v393
    %v399 = vsel %vm387, 0.0, %v388
    %v400 = vsel %vm379, %v399, 0.0
    %v401 = vsel %vm380, %v390, 0.0
    %v402 = vsel %vm381, %v392, 0.0
    %v403 = vsel %vm382, %v394, 0.0
    %vm404 = vcmp.lt.s32.totalorder %v375, 15
    %vm405 = vcmp.lt.s32.totalorder %v376, 15
    %vm406 = vcmp.lt.s32.totalorder %v377, 15
    %vm407 = vcmp.lt.s32.totalorder %v378, 15
    %vm408 = vcmask 1046528
    %v409 = vrot.slane %v322, 1
    %v410 = vrot.slane %v323, 1
    %v411 = vsel %vm408, %v409, %v410
    %v412 = vrot.slane %v324, 1
    %v413 = vsel %vm408, %v410, %v412
    %v414 = vrot.slane %v325, 1
    %v415 = vsel %vm408, %v412, %v414
    %v420 = vsel %vm408, %v414, 0.0
    %v421 = vsel %vm404, %v411, 0.0
    %v422 = vsel %vm405, %v413, 0.0
    %v423 = vsel %vm406, %v415, 0.0
    %v424 = vsel %vm407, %v420, 0.0
    %v425 = vld [vmem:[%s3] sm:$0xff]
    %v426 = vld [vmem:[%s3 + $0x8] sm:$0xff]
    %v427 = vld [vmem:[%s3 + $0x10] sm:$0xff]
    %v428 = vld [vmem:[%s3 + $0x18] sm:$0xff]
    %v429 = vld [vmem:[%s3 + $0x20] sm:$0xff]
    %v430 = vld [vmem:[%s3 + $0x28] sm:$0xff]
    %v431 = vld [vmem:[%s3 + $0x30] sm:$0xff]
    %v432 = vld [vmem:[%s3 + $0x38] sm:$0xff]
    %v433 = vld [vmem:[%s3 + $0x40] sm:$0xff]
    %v434 = vld [vmem:[%s3 + $0x48] sm:$0xff]
    %v435 = vld [vmem:[%s3 + $0x50] sm:$0xff]
    %v436 = vld [vmem:[%s3 + $0x58] sm:$0xff]
    %v437 = vld [vmem:[%s3 + $0x60] sm:$0xff]
    %v438 = vld [vmem:[%s3 + $0x68] sm:$0xff]
    %v439 = vld [vmem:[%s3 + $0x70] sm:$0xff]
    %v440 = vld [vmem:[%s3 + $0x78] sm:$0xff]
    %v441 = vld [vmem:[%s3 + $0x80] sm:$0xff]
    %v442 = vld [vmem:[%s3 + $0x88] sm:$0xff]
    %v443 = vld [vmem:[%s3 + $0x90] sm:$0xff]
    %v444 = vld [vmem:[%s3 + $0x98] sm:$0xff]
    %v445 = vld [vmem:[%s3 + $0xa0] sm:$0xff]
    %v446 = vld [vmem:[%s3 + $0xa8] sm:$0xff]
    %v447 = vld [vmem:[%s3 + $0xb0] sm:$0xff]
    %v448 = vld [vmem:[%s3 + $0xb8] sm:$0xff]
    %v449 = vld [vmem:[%s3 + $0xc0] sm:$0xff]
    %v450 = vld [vmem:[%s3 + $0xc8] sm:$0xff]
    %v451 = vld [vmem:[%s3 + $0xd0] sm:$0xff]
    %v452 = vld [vmem:[%s3 + $0xd8] sm:$0xff]
    %v453 = vld [vmem:[%s3 + $0xe0] sm:$0xff]
    %v454 = vld [vmem:[%s3 + $0xe8] sm:$0xff]
    %v455 = vld [vmem:[%s3 + $0xf0] sm:$0xff]
    %v456 = vld [vmem:[%s3 + $0xf8] sm:$0xff]
    %v457 = vld [vmem:[%s3 + $0x100] sm:$0xff]
    %v458 = vld [vmem:[%s3 + $0x108] sm:$0xff]
    %v459 = vld [vmem:[%s3 + $0x110] sm:$0xff]
    %v460 = vld [vmem:[%s3 + $0x118] sm:$0xff]
    %v461 = vld [vmem:[%s3 + $0x120] sm:$0xff]
    %v462 = vld [vmem:[%s3 + $0x128] sm:$0xff]
    %v463 = vld [vmem:[%s3 + $0x130] sm:$0xff]
    %v464 = vld [vmem:[%s3 + $0x138] sm:$0xff]
    %v465 = vld [vmem:[%s3 + $0x140] sm:$0xff]
    %v466 = vld [vmem:[%s3 + $0x148] sm:$0xff]
    %v467 = vld [vmem:[%s3 + $0x150] sm:$0xff]
    %v468 = vld [vmem:[%s3 + $0x158] sm:$0xff]
    %v469 = vld [vmem:[%s3 + $0x160] sm:$0xff]
    %v470 = vld [vmem:[%s3 + $0x168] sm:$0xff]
    %v471 = vld [vmem:[%s3 + $0x170] sm:$0xff]
    %v472 = vld [vmem:[%s3 + $0x178] sm:$0xff]
    %v473 = vlaneseq
    %v474 = vshrl.u32 %v473, 7
    %v475 = vsub.s32 3, %v474
    %v476 = vrot.slane %v38, %v475
    %477 = vmatprep.subr.mxu0 0.0
    %478 = vmatpush1.msra.mxu0 %v425
    %479 = vmatprep.subr.mxu0 0.0
    %480 = vmatpush1.msra.mxu0 %v426
    %481 = vmatprep.subr.mxu0 0.0
    %482 = vmatpush1.msra.mxu0 %v427
    %483 = vmatprep.subr.mxu0 0.0
    %484 = vmatpush1.msra.mxu0 %v428
    %485 = vmatprep.subr.mxu0 0.0
    %486 = vmatpush1.msra.mxu0 %v429
    %487 = vmatprep.subr.mxu0 0.0
    %488 = vmatpush1.msra.mxu0 %v430
    %489 = vmatprep.subr.mxu0 0.0
    %490 = vmatpush1.msra.mxu0 %v431
    %491 = vmatprep.subr.mxu0 0.0
    %492 = vmatpush1.msra.mxu0 %v432
    %493 = vmatprep.subr.mxu0 0.0
    %494 = vmatpush1.msra.mxu0 %v433
    %495 = vmatprep.subr.mxu0 0.0
    %496 = vmatpush1.msra.mxu0 %v434
    %497 = vmatprep.subr.mxu0 0.0
    %498 = vmatpush1.msra.mxu0 %v435
    %499 = vmatprep.subr.mxu0 0.0
    %500 = vmatpush1.msra.mxu0 %v436
    %501 = vmatprep.subr.mxu0 0.0
    %502 = vmatpush1.msra.mxu0 %v437
    %503 = vmatprep.subr.mxu0 0.0
    %504 = vmatpush1.msra.mxu0 %v438
    %505 = vmatprep.subr.mxu0 0.0
    %506 = vmatpush1.msra.mxu0 %v439
    %507 = vmatprep.subr.mxu0 0.0
    %508 = vmatpush1.msra.mxu0 %v440
    %509 = vmatprep.subr.mxu0 0.0
    %510 = vmatpush1.msra.mxu0 %v441
    %511 = vmatprep.subr.mxu0 0.0
    %512 = vmatpush1.msra.mxu0 %v442
    %513 = vmatprep.subr.mxu0 0.0
    %514 = vmatpush1.msra.mxu0 %v443
    %515 = vmatprep.subr.mxu0 0.0
    %516 = vmatpush1.msra.mxu0 %v444
    %517 = vmatprep.subr.mxu0 0.0
    %518 = vmatpush1.msra.mxu0 %v445
    %519 = vmatprep.subr.mxu0 0.0
    %520 = vmatpush1.msra.mxu0 %v446
    %521 = vmatprep.subr.mxu0 0.0
    %522 = vmatpush1.msra.mxu0 %v447
    %523 = vmatprep.subr.mxu0 0.0
    %524 = vmatpush1.msra.mxu0 %v448
    %525 = vmatprep.subr.mxu0 0.0
    %526 = vmatpush1.msra.mxu0 %v449
    %527 = vmatprep.subr.mxu0 0.0
    %528 = vmatpush1.msra.mxu0 %v450
    %529 = vmatprep.subr.mxu0 0.0
    %530 = vmatpush1.msra.mxu0 %v451
    %531 = vmatprep.subr.mxu0 0.0
    %532 = vmatpush1.msra.mxu0 %v452
    %533 = vmatprep.subr.mxu0 0.0
    %534 = vmatpush1.msra.mxu0 %v453
    %535 = vmatprep.subr.mxu0 0.0
    %536 = vmatpush1.msra.mxu0 %v454
    %537 = vmatprep.subr.mxu0 0.0
    %538 = vmatpush1.msra.mxu0 %v455
    %539 = vmatprep.subr.mxu0 0.0
    %540 = vmatpush1.msra.mxu0 %v456
    %541 = vmatprep.mubr.f32.mxu0 %v322
    %542 = vmatmul.mubr.f32.gmra.mrb[0].mxu0 %v400
    %v543 = vpop.f32.mrb[0].mxu0
    %v544 = vadd.f32 %v476, %v543
    %v545 = vpop.f32.mrb[0].mxu0
    %546 = vmatprep.mubr.f32.mxu0 %v323
    %547 = vmatmul.mubr.f32.gmra.mrb[0].mxu0 %v401
    %v548 = vpop.f32.mrb[0].mxu0
    %v549 = vadd.f32 %v476, %v548
    %v550 = vpop.f32.mrb[0].mxu0
    %551 = vmatprep.mubr.f32.mxu0 %v324
    %552 = vmatmul.mubr.f32.gmra.mrb[0].mxu0 %v402
    %v553 = vpop.f32.mrb[0].mxu0
    %v554 = vadd.f32 %v476, %v553
    %v555 = vpop.f32.mrb[0].mxu0
    %556 = vmatprep.mubr.f32.mxu0 %v325
    %557 = vmatmul.mubr.f32.gmra.mrb[0].mxu0 %v403
    %v558 = vpop.f32.mrb[0].mxu0
    %v559 = vadd.f32 %v476, %v558
    %v560 = vpop.f32.mrb[0].mxu0
    %561 = vdwg.mxu0
    %562 = vmatprep.subr.mxu0 0.0
    %563 = vmatpush1.msra.mxu0 %v457
    %564 = vmatprep.subr.mxu0 0.0
    %565 = vmatpush1.msra.mxu0 %v458
    %566 = vmatprep.subr.mxu0 0.0
    %567 = vmatpush1.msra.mxu0 %v459
    %568 = vmatprep.subr.mxu0 0.0
    %569 = vmatpush1.msra.mxu0 %v460
    %570 = vmatprep.subr.mxu0 0.0
    %571 = vmatpush1.msra.mxu0 %v461
    %572 = vmatprep.subr.mxu0 0.0
    %573 = vmatpush1.msra.mxu0 %v462
    %574 = vmatprep.subr.mxu0 0.0
    %575 = vmatpush1.msra.mxu0 %v463
    %576 = vmatprep.subr.mxu0 0.0
    %577 = vmatpush1.msra.mxu0 %v464
    %578 = vmatprep.subr.mxu0 0.0
    %579 = vmatpush1.msra.mxu0 %v465
    %580 = vmatprep.subr.mxu0 0.0
    %581 = vmatpush1.msra.mxu0 %v466
    %582 = vmatprep.subr.mxu0 0.0
    %583 = vmatpush1.msra.mxu0 %v467
    %584 = vmatprep.subr.mxu0 0.0
    %585 = vmatpush1.msra.mxu0 %v468
    %586 = vmatprep.subr.mxu0 0.0
    %587 = vmatpush1.msra.mxu0 %v469
    %588 = vmatprep.subr.mxu0 0.0
    %589 = vmatpush1.msra.mxu0 %v470
    %590 = vmatprep.subr.mxu0 0.0
    %591 = vmatpush1.msra.mxu0 %v471
    %592 = vmatprep.subr.mxu0 0.0
    %593 = vmatpush1.msra.mxu0 %v472
    %594 = vmatprep.subr.mxu0 0.0
    %595 = vmatpush1.msra.mxu0 0.0
    %596 = vmatprep.subr.mxu0 0.0
    %597 = vmatpush1.msra.mxu0 0.0
    %598 = vmatprep.subr.mxu0 0.0
    %599 = vmatpush1.msra.mxu0 0.0
    %600 = vmatprep.subr.mxu0 0.0
    %601 = vmatpush1.msra.mxu0 0.0
    %602 = vmatprep.subr.mxu0 0.0
    %603 = vmatpush1.msra.mxu0 0.0
    %604 = vmatprep.subr.mxu0 0.0
    %605 = vmatpush1.msra.mxu0 0.0
    %606 = vmatprep.subr.mxu0 0.0
    %607 = vmatpush1.msra.mxu0 0.0
    %608 = vmatprep.subr.mxu0 0.0
    %609 = vmatpush1.msra.mxu0 0.0
    %610 = vmatprep.subr.mxu0 0.0
    %611 = vmatpush1.msra.mxu0 0.0
    %612 = vmatprep.subr.mxu0 0.0
    %613 = vmatpush1.msra.mxu0 0.0
    %614 = vmatprep.subr.mxu0 0.0
    %615 = vmatpush1.msra.mxu0 0.0
    %616 = vmatprep.subr.mxu0 0.0
    %617 = vmatpush1.msra.mxu0 0.0
    %618 = vmatprep.subr.mxu0 0.0
    %619 = vmatpush1.msra.mxu0 0.0
    %620 = vmatprep.subr.mxu0 0.0
    %621 = vmatpush1.msra.mxu0 0.0
    %622 = vmatprep.subr.mxu0 0.0
    %623 = vmatpush1.msra.mxu0 0.0
    %624 = vmatprep.subr.mxu0 0.0
    %625 = vmatpush1.msra.mxu0 0.0
    %626 = vmatprep.mubr.f32.mxu0 0.0
    %627 = vmatmul.mubr.f32.gmra.mrb[0].mxu0 %v421
    %v628 = vpop.f32.mrb[0].mxu0
    %v629 = vadd.f32 %v544, %v628
    %v630 = vpop.f32.mrb[0].mxu0
    %631 = vmatprep.mubr.f32.mxu0 0.0
    %632 = vmatmul.mubr.f32.gmra.mrb[0].mxu0 %v422
    %v633 = vpop.f32.mrb[0].mxu0
    %v634 = vadd.f32 %v549, %v633
    %v635 = vpop.f32.mrb[0].mxu0
    %636 = vmatprep.mubr.f32.mxu0 0.0
    %637 = vmatmul.mubr.f32.gmra.mrb[0].mxu0 %v423
    %v638 = vpop.f32.mrb[0].mxu0
    %v639 = vadd.f32 %v554, %v638
    %v640 = vpop.f32.mrb[0].mxu0
    %641 = vmatprep.mubr.f32.mxu0 0.0
    %642 = vmatmul.mubr.f32.gmra.mrb[0].mxu0 %v424
    %v643 = vpop.f32.mrb[0].mxu0
    %v644 = vadd.f32 %v559, %v643
    %v645 = vpop.f32.mrb[0].mxu0
    %646 = vdwg.mxu0
    %647 = vst [vmem:[%s5] sm:$0xff] %v629
    %648 = vst [vmem:[%s5 + $0x8] sm:$0xff] %v634
    %649 = vst [vmem:[%s5 + $0x10] sm:$0xff] %v639
    %650 = vst [vmem:[%s5 + $0x18] sm:$0xff] %v644
    // Predicated region
    $region26: #{bsconvu_apply.1} parent=1 // pred_check
      _
    $region27: #{bsconvu_apply.1} parent=1 // pred_check_branch
      %652 = sbr.rel (0) target = $region29
    $region28: #{bsconvu_apply.1} parent=1 // pred_region
      _
    $region29: #{bsconvu_apply.1} parent=1 // pred_fallthru
      _
    // Predicated region
    $region30: #{bsconvu_apply.1} parent=1 // pred_check
      _
    $region31: #{bsconvu_apply.1} parent=1 // pred_check_branch
      %654 = sbr.rel (0) target = $region33
    $region32: #{bsconvu_apply.1} parent=1 // pred_region
      _
    $region33: #{bsconvu_apply.1} parent=1 // pred_fallthru
      _
    %655 = vsyncpa [#allocation3], 1

</llo_original>
